<compile_context>
chip_gen: v7x
topology: tpu7x:2x2x1
jax: 0.10.0
libtpu: 0.0.40
codegen_flags: <defaults>
</compile_context>

<pallas_src>
import jax
import jax.numpy as jnp
from jax.experimental import pallas as pl
from jax.experimental.pallas import tpu as pltpu


def _vmem_capacity_bytes():
    """Physical per-core VMEM, used to size tiles per TPU generation."""
    try:
        return int(pltpu.get_tpu_info().vmem_capacity_bytes)
    except Exception:
        return 64 << 20  # conservative (v7x per-core size)


def _pick_tiles(B, K, O, w_itemsize, z_itemsize, vmem_budget_bytes):
    """Choose (tile_k, tile_o): W tile is (tile_k, tile_o), lane-dense in O."""
    bytes_f32 = 4

    # ---- candidate O tiles (lane axis of W_flat / output: unmasked stores) ----
    if O % 128 == 0:
        o_cands = [d for d in range(128, O + 1, 128) if O % d == 0 and d <= 2048]
        if not o_cands:
            o_cands = [O]
        # Keep num_o >= 2 on large O so v7x's second TensorCore has work
        # (harmless on single-core v5e/v6e: tiles stay >= 512 lanes wide).
        if O >= 1024:
            pruned = [d for d in o_cands if O // d >= 2]
            if pruned:
                o_cands = pruned
    else:
        o_cands = [O]  # ragged O: full-extent block (exempt from the 128 rule)
    o_cands = sorted(set(o_cands), reverse=True)

    # ---- candidate K tiles (sublane axis of W_flat, lane axis of Z) ----
    if K % 128 == 0:
        k_cands = [d for d in range(128, K + 1, 128) if K % d == 0]
    else:
        k_cands = [K]  # ragged K: full-extent block (exempt)
    k_cands = sorted(set(k_cands), reverse=True)

    # Prefer the largest O tile, then the largest K tile that fits: bigger /
    # fewer W DMAs amortize the ~0.35us per-grid-step overhead.
    for to in o_cands:
        fixed = (2 * B * to * bytes_f32      # output tile (double-buffered)
                 + B * to * bytes_f32        # f32 accumulator scratch
                 + 2 * to * bytes_f32)       # bias tile
        avail = vmem_budget_bytes - fixed
        for tk in k_cands:
            need = (2 * tk * to * w_itemsize     # W tile, double-buffered
                    + 2 * B * tk * z_itemsize)   # Z tile, double-buffered
            if need <= avail:
                return tk, to
    # Nothing fit the budget: smallest tiles; caller raises vmem_limit_bytes.
    return min(k_cands), min(o_cands)


def _bilinear_kernel(z_ref, w_ref, b_ref, o_ref, acc_ref):
    """Multi-K-tile path: streamed W, f32 accumulator, bias epilogue."""
    k = pl.program_id(1)  # reduction axis (last grid dim)

    @pl.when(k == 0)
    def _():
        acc_ref[...] = jnp.zeros_like(acc_ref)

    # Whole (i, j) reduction lives on the MXU; output lane axis is O.
    acc_ref[...] += jnp.dot(z_ref[...], w_ref[...],
                            preferred_element_type=jnp.float32)

    @pl.when(k == pl.num_programs(1) - 1)
    def _():
        o_ref[...] = (acc_ref[...] + b_ref[...]).astype(o_ref.dtype)


def _bilinear_kernel_single_k(z_ref, w_ref, b_ref, o_ref):
    """num_k == 1 fast path: no scratch accumulator, no predication."""
    o_ref[...] = (jnp.dot(z_ref[...], w_ref[...],
                          preferred_element_type=jnp.float32)
                  + b_ref[...]).astype(o_ref.dtype)


def bilinear_forward(x1, x2, w, b, *, weight_dtype=jnp.bfloat16,
                     vmem_budget_bytes=None):
    """x1: (B, I1), x2: (B, I2), w: (O, I1, I2), b: (O,) -> (B, O) float32.

    weight_dtype: dtype W (and the Z outer product) are cast to before the MXU
    matmul.  Default bf16 (HBM-bound regime: halves W traffic, native MXU
    path); pass jnp.float32 for exact f32 numerics, or None to keep w.dtype.
    """
    B, I1 = x1.shape
    O, I1_w, I2 = w.shape
    assert I1 == I1_w and x2.shape == (B, I2)
    K = I1 * I2

    cap = _vmem_capacity_bytes()
    if vmem_budget_bytes is None:
        # 128 MiB parts (v5e/v6e): ~60%; 64 MiB parts (v7x): ~45%.
        frac = 0.60 if cap >= (96 << 20) else 0.45
        vmem_budget_bytes = int(cap * frac)

    # --- Plain-JAX glue: lane-dense-in-O weight slab, rows ordered (i, j). ---
    w_flat = jnp.transpose(w, (1, 2, 0)).reshape(K, O)
    if weight_dtype is not None:
        w_flat = w_flat.astype(weight_dtype)
    # Hoisted Z (removes the in-kernel cross-lane relayout): only B*K elements.
    z = (x1[:, :, None] * x2[:, None, :]).reshape(B, K).astype(w_flat.dtype)
    b2 = b.reshape(1, O).astype(jnp.float32)

    tile_k, tile_o = _pick_tiles(B, K, O, w_flat.dtype.itemsize,
                                 z.dtype.itemsize, vmem_budget_bytes)
    num_k = K // tile_k
    num_o = O // tile_o

    # vmem_limit: actual usage + headroom for Mosaic internal scratch, never
    # below 32 MiB (v5e's scoped default is only 16 MiB) and <= ~70% physical.
    usage = (2 * B * tile_k * z.dtype.itemsize
             + 2 * tile_k * tile_o * w_flat.dtype.itemsize
             + 3 * B * tile_o * 4
             + 2 * tile_o * 4)
    vmem_limit_bytes = int(min(cap * 7 // 10, max(32 << 20, usage + (8 << 20))))

    out_shape = jax.ShapeDtypeStruct((B, O), jnp.float32)

    if num_k == 1:
        return pl.pallas_call(
            _bilinear_kernel_single_k,
            out_shape=out_shape,
            grid=(num_o,),
            in_specs=[
                pl.BlockSpec((B, K), lambda o: (0, 0)),            # Z (resident)
                pl.BlockSpec((K, tile_o), lambda o: (0, o)),       # W_flat
                pl.BlockSpec((1, tile_o), lambda o: (0, o)),       # bias
            ],
            out_specs=pl.BlockSpec((B, tile_o), lambda o: (0, o)),
            compiler_params=pltpu.CompilerParams(
                dimension_semantics=("parallel",),
                vmem_limit_bytes=vmem_limit_bytes,
            ),
        )(z, w_flat, b2)

    return pl.pallas_call(
        _bilinear_kernel,
        out_shape=out_shape,
        grid=(num_o, num_k),                                        # reduction last
        in_specs=[
            pl.BlockSpec((B, tile_k), lambda o, k: (0, k)),         # Z slab
            pl.BlockSpec((tile_k, tile_o), lambda o, k: (k, o)),    # W_flat (streamed)
            pl.BlockSpec((1, tile_o), lambda o, k: (0, o)),         # bias
        ],
        out_specs=pl.BlockSpec((B, tile_o), lambda o, k: (0, o)),
        scratch_shapes=[pltpu.VMEM((B, tile_o), jnp.float32)],      # f32 accumulator
        compiler_params=pltpu.CompilerParams(
            dimension_semantics=("parallel", "arbitrary"),
            vmem_limit_bytes=vmem_limit_bytes,
        ),
    )(z, w_flat, b2)


def init_bilinear_params(key, input1, input2, output):
    """Deterministic init matching the PyTorch module.

    kaiming_normal_(w, mode='fan_in', nonlinearity='relu') on (O, I1, I2)
    uses fan_in = I1 * I2, gain = sqrt(2)  =>  std = sqrt(2 / (I1 * I2)).
    Bias is zeros.
    """
    std = (2.0 / (input1 * input2)) ** 0.5
    w = jax.random.normal(key, (output, input1, input2), dtype=jnp.float32) * std
    b = jnp.zeros((output,), dtype=jnp.float32)
    return w, b


if __name__ == "__main__":
    key = jax.random.PRNGKey(0)
    kw, k1, k2, kw2, k3, k4 = jax.random.split(key, 6)

    # --- Test 1: module-sized shapes, default bf16 weight path (single-tile
    #     fast path; grid (1,)). ---
    B, I1, I2, O = 8, 32, 16, 24
    w, b = init_bilinear_params(kw, I1, I2, O)
    x1 = jax.random.normal(k1, (B, I1), dtype=jnp.float32)
    x2 = jax.random.normal(k2, (B, I2), dtype=jnp.float32)
    ref = jnp.einsum("bi,oij,bj->bo", x1, w, x2) + b

    out = jax.block_until_ready(bilinear_forward(x1, x2, w, b))
    assert out.shape == (B, O)
    assert jnp.allclose(out, ref, atol=5e-2, rtol=5e-2), (
        float(jnp.max(jnp.abs(out - ref))))

    # --- Test 2: exact f32 weight path (tight tolerance). ---
    out32 = jax.block_until_ready(
        bilinear_forward(x1, x2, w, b, weight_dtype=jnp.float32))
    assert jnp.allclose(out32, ref, atol=1e-4, rtol=1e-4), (
        float(jnp.max(jnp.abs(out32 - ref))))

    # --- Test 3: larger shape + small VMEM budget -> real (O, K) grid with
    #     streamed W tiles and the k-accumulator pattern (f32, exact). ---
    B2, I1b, I2b, Ob = 16, 64, 32, 1024
    wl, bl = init_bilinear_params(kw2, I1b, I2b, Ob)
    x1l = jax.random.normal(k3, (B2, I1b), dtype=jnp.float32)
    x2l = jax.random.normal(k4, (B2, I2b), dtype=jnp.float32)
    refl = jnp.einsum("bi,oij,bj->bo", x1l, wl, x2l) + bl

    outl = jax.block_until_ready(
        bilinear_forward(x1l, x2l, wl, bl, weight_dtype=jnp.float32,
                         vmem_budget_bytes=8 << 20))
    assert outl.shape == (B2, Ob)
    assert jnp.allclose(outl, refl, atol=1e-3, rtol=1e-3), (
        float(jnp.max(jnp.abs(outl - refl))))

    # --- Test 4: default bf16 path on the larger shape + small budget
    #     (O tiled, num_o >= 2). ---
    outlb = jax.block_until_ready(
        bilinear_forward(x1l, x2l, wl, bl, vmem_budget_bytes=8 << 20))
    assert jnp.allclose(outlb, refl, atol=5e-2, rtol=5e-2), (
        float(jnp.max(jnp.abs(outlb - refl))))

    print("KERNEL_OK")
</pallas_src>

<mosaic_0001>
module attributes {stable_mosaic.version = 11 : i64} {
  func.func @_bilinear_kernel_single_k(%arg0: i32, %arg1: memref<8x512xbf16, #tpu.memory_space<vmem>>, %arg2: memref<512x24xbf16, #tpu.memory_space<vmem>>, %arg3: memref<1x24xf32, #tpu.memory_space<vmem>>, %arg4: memref<8x24xf32, #tpu.memory_space<vmem>>) attributes {dimension_semantics = [#tpu.dimension_semantics<parallel>], iteration_bounds = array<i64: 1>, scalar_prefetch = 0 : i64, scratch_operands = 0 : i64, tpu.core_type = #tpu.core_type<tc>, window_params = [{pipeline_mode = #tpu.pipeline_mode<synchronous>, transform_indices = @transform_0, window_bounds = array<i64: 8, 512>}, {transform_indices = @transform_1, window_bounds = array<i64: 512, 24>}, {transform_indices = @transform_2, window_bounds = array<i64: 1, 24>}, {transform_indices = @transform_3, window_bounds = array<i64: 8, 24>}]} {
    %c0 = arith.constant 0 : index
    %c0_0 = arith.constant 0 : index
    %0 = vector.load %arg1[%c0, %c0_0] : memref<8x512xbf16, #tpu.memory_space<vmem>>, vector<8x512xbf16>
    %c0_1 = arith.constant 0 : index
    %c0_2 = arith.constant 0 : index
    %1 = vector.load %arg2[%c0_1, %c0_2] : memref<512x24xbf16, #tpu.memory_space<vmem>>, vector<512x24xbf16>
    %cst = arith.constant dense<0.000000e+00> : vector<8x24xf32>
    %2 = tpu.matmul %0, %1, %cst {dimension_numbers = #tpu.dot_dimension_numbers<[1], [0], [0], [1], [0, 0, 1, 1], [], []>} : vector<8x512xbf16>, vector<512x24xbf16>, vector<8x24xf32> -> vector<8x24xf32>
    %c0_3 = arith.constant 0 : index
    %c0_4 = arith.constant 0 : index
    %3 = vector.load %arg3[%c0_3, %c0_4] : memref<1x24xf32, #tpu.memory_space<vmem>>, vector<1x24xf32>
    %4 = vector.broadcast %3 : vector<1x24xf32> to vector<8x24xf32>
    %5 = arith.addf %2, %4 : vector<8x24xf32>
    %c0_5 = arith.constant 0 : index
    %c0_6 = arith.constant 0 : index
    %6 = vector.load %arg4[%c0_5, %c0_6] : memref<8x24xf32, #tpu.memory_space<vmem>>, vector<8x24xf32>
    tpu.vector_store %arg4[%c0_5, %c0_6], %5 {strides = array<i32>} : memref<8x24xf32, #tpu.memory_space<vmem>>, vector<8x24xf32>,
    return
  }
  func.func @transform_0(%arg0: i32) -> (i32, i32) {
    %c0_i32 = arith.constant 0 : i32
    %c0_i32_0 = arith.constant 0 : i32
    %c0_i32_1 = arith.constant 0 : i32
    return %c0_i32, %c0_i32_0 : i32, i32
  }
  func.func @transform_1(%arg0: i32) -> (i32, i32) {
    %c0_i32 = arith.constant 0 : i32
    %c0_i32_0 = arith.constant 0 : i32
    return %c0_i32, %arg0 : i32, i32
  }
  func.func @transform_2(%arg0: i32) -> (i32, i32) {
    %c0_i32 = arith.constant 0 : i32
    %c0_i32_0 = arith.constant 0 : i32
    return %c0_i32, %arg0 : i32, i32
  }
  func.func @transform_3(%arg0: i32) -> (i32, i32) {
    %c0_i32 = arith.constant 0 : i32
    %c0_i32_0 = arith.constant 0 : i32
    return %c0_i32, %arg0 : i32, i32
  }
}

</mosaic_0001>

<llo_original>
// kernel: tpu_custom_call.1
$region0: #{tpu_custom_call.1}
  #allocation0 [shape = 'u32[]', space=smem, size = 0x4, offset = 0x4, fixed_abs, tag = 'smem constant byte address 0x4 - core index']
  #allocation1 [shape = 'u32[144,128]{1,0:T(1,128)}', space=vmem, size = 0x12000, scoped, tag = 'internal scratch']
  %s0 = inlined_call_operand.vmem [shape: bf16[8,512], index: 0, kind: input, shape index: {}]
  %s1 = inlined_call_operand.vmem [shape: bf16[512,24], index: 1, kind: input, shape index: {}]
  %s2 = inlined_call_operand.vmem [shape: f32[1,24], index: 2, kind: input, shape index: {}]
  %s3 = inlined_call_operand.hbm [shape: f32[8,24], index: 3, kind: output, shape index: {}]
  %s4 = sld [smem:[#allocation0]]
  $region22: #{tpu_custom_call.1} parent=0
    _
  %s6 = ssub.s32 1, %s4
  %s7 = scalar_select 0, %s6, %s4
  $region1: #{tpu_custom_call.1} parent=0
    #allocation2 [shape = 'u8[4096]{0}', space=vmem, size = 0x1000, scoped, tag = 'output window, operand 0, single buffered']
    #allocation3 [shape = 's32[1]{0}', space=sflag, size = 0x4, scoped, tag = 'scoped memory for tpu_custom_call.1']
    %8 = vsyncpa [#allocation3], 0
    // Predicated region
    $region2: #{tpu_custom_call.1} parent=1 // pred_check
      _
    $region3: #{tpu_custom_call.1} parent=1 // pred_check_branch
      %10 = sbr.rel (0) target = $region5
    $region4: #{tpu_custom_call.1} parent=1 // pred_region
      _
    $region5: #{tpu_custom_call.1} parent=1 // pred_fallthru
      _
    // Predicated region
    $region6: #{tpu_custom_call.1} parent=1 // pred_check
      _
    $region7: #{tpu_custom_call.1} parent=1 // pred_check_branch
      %12 = sbr.rel (0) target = $region9
    $region8: #{tpu_custom_call.1} parent=1 // pred_region
      _
    $region9: #{tpu_custom_call.1} parent=1 // pred_fallthru
      _
    // Predicated region
    $region10: #{tpu_custom_call.1} parent=1 // pred_check
      _
    $region11: #{tpu_custom_call.1} parent=1 // pred_check_branch
      %14 = sbr.rel (0) target = $region13
    $region12: #{tpu_custom_call.1} parent=1 // pred_region
      _
    $region13: #{tpu_custom_call.1} parent=1 // pred_fallthru
      _
    %v16 = vld [vmem:[%s0] sm:$0xff]
    %v17 = vld [vmem:[%s0 + $0x8] sm:$0xff]
    %v18 = vld [vmem:[%s1] sm:$0xf]
    %v19 = vld [vmem:[%s1 + $0x4] sm:$0xf]
    %v20 = vld [vmem:[%s1 + $0x8] sm:$0xf]
    %v21 = vld [vmem:[%s1 + $0xc] sm:$0xf]
    %v22 = vld [vmem:[%s1 + $0x10] sm:$0xf]
    %v23 = vld [vmem:[%s1 + $0x14] sm:$0xf]
    %v24 = vld [vmem:[%s1 + $0x18] sm:$0xf]
    %v25 = vld [vmem:[%s1 + $0x1c] sm:$0xf]
    %v26 = vld [vmem:[%s1 + $0x20] sm:$0xf]
    %v27 = vld [vmem:[%s1 + $0x24] sm:$0xf]
    %v28 = vld [vmem:[%s1 + $0x28] sm:$0xf]
    %v29 = vld [vmem:[%s1 + $0x2c] sm:$0xf]
    %v30 = vld [vmem:[%s1 + $0x30] sm:$0xf]
    %v31 = vld [vmem:[%s1 + $0x34] sm:$0xf]
    %v32 = vld [vmem:[%s1 + $0x38] sm:$0xf]
    %v33 = vld [vmem:[%s1 + $0x3c] sm:$0xf]
    %v34 = vld [vmem:[%s1 + $0x40] sm:$0xf]
    %v35 = vld [vmem:[%s1 + $0x44] sm:$0xf]
    %v36 = vld [vmem:[%s1 + $0x48] sm:$0xf]
    %v37 = vld [vmem:[%s1 + $0x4c] sm:$0xf]
    %v38 = vld [vmem:[%s1 + $0x50] sm:$0xf]
    %v39 = vld [vmem:[%s1 + $0x54] sm:$0xf]
    %v40 = vld [vmem:[%s1 + $0x58] sm:$0xf]
    %v41 = vld [vmem:[%s1 + $0x5c] sm:$0xf]
    %v42 = vld [vmem:[%s1 + $0x60] sm:$0xf]
    %v43 = vld [vmem:[%s1 + $0x64] sm:$0xf]
    %v44 = vld [vmem:[%s1 + $0x68] sm:$0xf]
    %v45 = vld [vmem:[%s1 + $0x6c] sm:$0xf]
    %v46 = vld [vmem:[%s1 + $0x70] sm:$0xf]
    %v47 = vld [vmem:[%s1 + $0x74] sm:$0xf]
    %v48 = vld [vmem:[%s1 + $0x78] sm:$0xf]
    %v49 = vld [vmem:[%s1 + $0x7c] sm:$0xf]
    %v50 = vld [vmem:[%s1 + $0x80] sm:$0xf]
    %v51 = vld [vmem:[%s1 + $0x84] sm:$0xf]
    %v52 = vld [vmem:[%s1 + $0x88] sm:$0xf]
    %v53 = vld [vmem:[%s1 + $0x8c] sm:$0xf]
    %v54 = vld [vmem:[%s1 + $0x90] sm:$0xf]
    %v55 = vld [vmem:[%s1 + $0x94] sm:$0xf]
    %v56 = vld [vmem:[%s1 + $0x98] sm:$0xf]
    %v57 = vld [vmem:[%s1 + $0x9c] sm:$0xf]
    %v58 = vld [vmem:[%s1 + $0xa0] sm:$0xf]
    %v59 = vld [vmem:[%s1 + $0xa4] sm:$0xf]
    %v60 = vld [vmem:[%s1 + $0xa8] sm:$0xf]
    %v61 = vld [vmem:[%s1 + $0xac] sm:$0xf]
    %v62 = vld [vmem:[%s1 + $0xb0] sm:$0xf]
    %v63 = vld [vmem:[%s1 + $0xb4] sm:$0xf]
    %v64 = vld [vmem:[%s1 + $0xb8] sm:$0xf]
    %v65 = vld [vmem:[%s1 + $0xbc] sm:$0xf]
    %v66 = vld [vmem:[%s1 + $0xc0] sm:$0xf]
    %v67 = vld [vmem:[%s1 + $0xc4] sm:$0xf]
    %v68 = vld [vmem:[%s1 + $0xc8] sm:$0xf]
    %v69 = vld [vmem:[%s1 + $0xcc] sm:$0xf]
    %v70 = vld [vmem:[%s1 + $0xd0] sm:$0xf]
    %v71 = vld [vmem:[%s1 + $0xd4] sm:$0xf]
    %v72 = vld [vmem:[%s1 + $0xd8] sm:$0xf]
    %v73 = vld [vmem:[%s1 + $0xdc] sm:$0xf]
    %v74 = vld [vmem:[%s1 + $0xe0] sm:$0xf]
    %v75 = vld [vmem:[%s1 + $0xe4] sm:$0xf]
    %v76 = vld [vmem:[%s1 + $0xe8] sm:$0xf]
    %v77 = vld [vmem:[%s1 + $0xec] sm:$0xf]
    %v78 = vld [vmem:[%s1 + $0xf0] sm:$0xf]
    %v79 = vld [vmem:[%s1 + $0xf4] sm:$0xf]
    %v80 = vld [vmem:[%s1 + $0xf8] sm:$0xf]
    %v81 = vld [vmem:[%s1 + $0xfc] sm:$0xf]
    %v82 = vld [vmem:[%s2] sm:$0x1]
    %v84 = vlaneseq
    %v85 = vshrl.u32 %v84, 7
    %v86 = vsub.s32 0, %v85
    %v87 = vrot.slane %v82, %v86
    %v91 = vunpack.c.l.b16 %v16
    %v92 = vunpack.c.h.b16 %v16
    %v93 = vunpack.c.l.b16 %v17
    %v94 = vunpack.c.h.b16 %v17
    %v95 = vpack.c.b16 %v91, %v91
    %v96 = vpack.c.b16 %v92, %v92
    %v97 = vpack.c.b16 %v93, %v93
    %v98 = vpack.c.b16 %v94, %v94
    %v167 = vunpack.c.l.b16 %v18
    %v168 = vunpack.c.l.b16 %v19
    %v169 = vunpack.c.l.b16 %v20
    %v170 = vunpack.c.l.b16 %v21
    %v171 = vunpack.c.l.b16 %v22
    %v172 = vunpack.c.l.b16 %v23
    %v173 = vunpack.c.l.b16 %v24
    %v174 = vunpack.c.l.b16 %v25
    %v175 = vunpack.c.l.b16 %v26
    %v176 = vunpack.c.l.b16 %v27
    %v177 = vunpack.c.l.b16 %v28
    %v178 = vunpack.c.l.b16 %v29
    %v179 = vunpack.c.l.b16 %v30
    %v180 = vunpack.c.l.b16 %v31
    %v181 = vunpack.c.l.b16 %v32
    %v182 = vunpack.c.l.b16 %v33
    %v183 = vunpack.c.l.b16 %v34
    %v184 = vunpack.c.l.b16 %v35
    %v185 = vunpack.c.l.b16 %v36
    %v186 = vunpack.c.l.b16 %v37
    %v187 = vunpack.c.l.b16 %v38
    %v188 = vunpack.c.l.b16 %v39
    %v189 = vunpack.c.l.b16 %v40
    %v190 = vunpack.c.l.b16 %v41
    %v191 = vunpack.c.l.b16 %v42
    %v192 = vunpack.c.l.b16 %v43
    %v193 = vunpack.c.l.b16 %v44
    %v194 = vunpack.c.l.b16 %v45
    %v195 = vunpack.c.l.b16 %v46
    %v196 = vunpack.c.l.b16 %v47
    %v197 = vunpack.c.l.b16 %v48
    %v198 = vunpack.c.l.b16 %v49
    %v199 = vunpack.c.l.b16 %v50
    %v200 = vunpack.c.l.b16 %v51
    %v201 = vunpack.c.l.b16 %v52
    %v202 = vunpack.c.l.b16 %v53
    %v203 = vunpack.c.l.b16 %v54
    %v204 = vunpack.c.l.b16 %v55
    %v205 = vunpack.c.l.b16 %v56
    %v206 = vunpack.c.l.b16 %v57
    %v207 = vunpack.c.l.b16 %v58
    %v208 = vunpack.c.l.b16 %v59
    %v209 = vunpack.c.l.b16 %v60
    %v210 = vunpack.c.l.b16 %v61
    %v211 = vunpack.c.l.b16 %v62
    %v212 = vunpack.c.l.b16 %v63
    %v213 = vunpack.c.l.b16 %v64
    %v214 = vunpack.c.l.b16 %v65
    %v215 = vunpack.c.l.b16 %v66
    %v216 = vunpack.c.l.b16 %v67
    %v217 = vunpack.c.l.b16 %v68
    %v218 = vunpack.c.l.b16 %v69
    %v219 = vunpack.c.l.b16 %v70
    %v220 = vunpack.c.l.b16 %v71
    %v221 = vunpack.c.l.b16 %v72
    %v222 = vunpack.c.l.b16 %v73
    %v223 = vunpack.c.l.b16 %v74
    %v224 = vunpack.c.l.b16 %v75
    %v225 = vunpack.c.l.b16 %v76
    %v226 = vunpack.c.l.b16 %v77
    %v227 = vunpack.c.l.b16 %v78
    %v228 = vunpack.c.l.b16 %v79
    %v229 = vunpack.c.l.b16 %v80
    %v230 = vunpack.c.l.b16 %v81
    %v231 = vpack.c.b16 %v168, %v167
    %v232 = vpack.c.b16 %v170, %v169
    %v233 = vpack.c.b16 %v172, %v171
    %v234 = vpack.c.b16 %v174, %v173
    %v235 = vpack.c.b16 %v176, %v175
    %v236 = vpack.c.b16 %v178, %v177
    %v237 = vpack.c.b16 %v180, %v179
    %v238 = vpack.c.b16 %v182, %v181
    %v239 = vpack.c.b16 %v184, %v183
    %v240 = vpack.c.b16 %v186, %v185
    %v241 = vpack.c.b16 %v188, %v187
    %v242 = vpack.c.b16 %v190, %v189
    %v243 = vpack.c.b16 %v192, %v191
    %v244 = vpack.c.b16 %v194, %v193
    %v245 = vpack.c.b16 %v196, %v195
    %v246 = vpack.c.b16 %v198, %v197
    %v247 = vpack.c.b16 %v200, %v199
    %v248 = vpack.c.b16 %v202, %v201
    %v249 = vpack.c.b16 %v204, %v203
    %v250 = vpack.c.b16 %v206, %v205
    %v251 = vpack.c.b16 %v208, %v207
    %v252 = vpack.c.b16 %v210, %v209
    %v253 = vpack.c.b16 %v212, %v211
    %v254 = vpack.c.b16 %v214, %v213
    %v255 = vpack.c.b16 %v216, %v215
    %v256 = vpack.c.b16 %v218, %v217
    %v257 = vpack.c.b16 %v220, %v219
    %v258 = vpack.c.b16 %v222, %v221
    %v259 = vpack.c.b16 %v224, %v223
    %v260 = vpack.c.b16 %v226, %v225
    %v261 = vpack.c.b16 %v228, %v227
    %v262 = vpack.c.b16 %v230, %v229
    %295 = vmatprep.subr.bf16.mxu0 0
    %296 = vmatpush1.bf16.msra.mxu0 %v231
    %297 = vmatprep.subr.bf16.mxu0 0
    %298 = vmatpush1.bf16.msra.mxu0 %v232
    %299 = vmatprep.subr.bf16.mxu0 0
    %300 = vmatpush1.bf16.msra.mxu0 %v233
    %301 = vmatprep.subr.bf16.mxu0 0
    %302 = vmatpush1.bf16.msra.mxu0 %v234
    %303 = vmatprep.subr.bf16.mxu0 0
    %304 = vmatpush1.bf16.msra.mxu0 %v235
    %305 = vmatprep.subr.bf16.mxu0 0
    %306 = vmatpush1.bf16.msra.mxu0 %v236
    %307 = vmatprep.subr.bf16.mxu0 0
    %308 = vmatpush1.bf16.msra.mxu0 %v237
    %309 = vmatprep.subr.bf16.mxu0 0
    %310 = vmatpush1.bf16.msra.mxu0 %v238
    %311 = vmatprep.subr.bf16.mxu0 0
    %312 = vmatpush1.bf16.msra.mxu0 %v239
    %313 = vmatprep.subr.bf16.mxu0 0
    %314 = vmatpush1.bf16.msra.mxu0 %v240
    %315 = vmatprep.subr.bf16.mxu0 0
    %316 = vmatpush1.bf16.msra.mxu0 %v241
    %317 = vmatprep.subr.bf16.mxu0 0
    %318 = vmatpush1.bf16.msra.mxu0 %v242
    %319 = vmatprep.subr.bf16.mxu0 0
    %320 = vmatpush1.bf16.msra.mxu0 %v243
    %321 = vmatprep.subr.bf16.mxu0 0
    %322 = vmatpush1.bf16.msra.mxu0 %v244
    %323 = vmatprep.subr.bf16.mxu0 0
    %324 = vmatpush1.bf16.msra.mxu0 %v245
    %325 = vmatprep.subr.bf16.mxu0 0
    %326 = vmatpush1.bf16.msra.mxu0 %v246
    %327 = vmatprep.mubr.bf16.mxu0 %v96
    %328 = vmatmul.mubr.bf16.gmra.mrb[0].mxu0 %v95
    %v329 = vpop.f32.mrb[0].mxu0
    %v330 = vadd.f32 %v87, %v329
    %v331 = vpop.f32.mrb[0].mxu0
    %v332 = vpop.f32.mrb[0].mxu0
    %v333 = vpop.f32.mrb[0].mxu0
    %334 = vdwg.mxu0
    %335 = vmatprep.subr.bf16.mxu0 0
    %336 = vmatpush1.bf16.msra.mxu0 %v247
    %337 = vmatprep.subr.bf16.mxu0 0
    %338 = vmatpush1.bf16.msra.mxu0 %v248
    %339 = vmatprep.subr.bf16.mxu0 0
    %340 = vmatpush1.bf16.msra.mxu0 %v249
    %341 = vmatprep.subr.bf16.mxu0 0
    %342 = vmatpush1.bf16.msra.mxu0 %v250
    %343 = vmatprep.subr.bf16.mxu0 0
    %344 = vmatpush1.bf16.msra.mxu0 %v251
    %345 = vmatprep.subr.bf16.mxu0 0
    %346 = vmatpush1.bf16.msra.mxu0 %v252
    %347 = vmatprep.subr.bf16.mxu0 0
    %348 = vmatpush1.bf16.msra.mxu0 %v253
    %349 = vmatprep.subr.bf16.mxu0 0
    %350 = vmatpush1.bf16.msra.mxu0 %v254
    %351 = vmatprep.subr.bf16.mxu0 0
    %352 = vmatpush1.bf16.msra.mxu0 %v255
    %353 = vmatprep.subr.bf16.mxu0 0
    %354 = vmatpush1.bf16.msra.mxu0 %v256
    %355 = vmatprep.subr.bf16.mxu0 0
    %356 = vmatpush1.bf16.msra.mxu0 %v257
    %357 = vmatprep.subr.bf16.mxu0 0
    %358 = vmatpush1.bf16.msra.mxu0 %v258
    %359 = vmatprep.subr.bf16.mxu0 0
    %360 = vmatpush1.bf16.msra.mxu0 %v259
    %361 = vmatprep.subr.bf16.mxu0 0
    %362 = vmatpush1.bf16.msra.mxu0 %v260
    %363 = vmatprep.subr.bf16.mxu0 0
    %364 = vmatpush1.bf16.msra.mxu0 %v261
    %365 = vmatprep.subr.bf16.mxu0 0
    %366 = vmatpush1.bf16.msra.mxu0 %v262
    %367 = vmatprep.mubr.bf16.mxu0 %v98
    %368 = vmatmul.mubr.bf16.gmra.mrb[0].mxu0 %v97
    %v369 = vpop.f32.mrb[0].mxu0
    %v370 = vadd.f32 %v330, %v369
    %v371 = vpop.f32.mrb[0].mxu0
    %v372 = vpop.f32.mrb[0].mxu0
    %v373 = vpop.f32.mrb[0].mxu0
    %374 = vdwg.mxu0
    %vm375 = vcmask 195584
    %376 = vst.msk [vmem:[#allocation2] sm:$0xff] %vm375, %v370
    // Predicated region
    $region14: #{tpu_custom_call.1} parent=1 // pred_check
      _
    $region15: #{tpu_custom_call.1} parent=1 // pred_check_branch
      %378 = sbr.rel (0) target = $region17
    $region16: #{tpu_custom_call.1} parent=1 // pred_region
      %s380 = ssub.s32 128, 128
      %381 = vsyncadd [#allocation3], %s380
      %s383 = sshll.u32 [#allocation2], 4
      %s384 = int_to_ptr.vmem [resolvable:$true] %s383
      %386 = dma.vmem_to_hbm [thread:$0]  %s384, 128, %s3, [#allocation3]
    $region17: #{tpu_custom_call.1} parent=1 // pred_fallthru
      _
    // Predicated region
    $region18: #{tpu_custom_call.1} parent=1 // pred_check
      _
    $region19: #{tpu_custom_call.1} parent=1 // pred_check_branch
      %388 = sbr.rel (0) target = $region21
    $region20: #{tpu_custom_call.1} parent=1 // pred_region
      %389 = dma.done [#allocation3], 128
    $region21: #{tpu_custom_call.1} parent=1 // pred_fallthru
      _
    %390 = vsyncpa [#allocation3], 1

</llo_original>
